<compile_context>
chip_gen: v7x
topology: tpu7x:2x2x1
jax: 0.10.0
libtpu: 0.0.40
codegen_flags: <defaults>
</compile_context>

<pallas_src>
import jax
import jax.numpy as jnp
from jax.experimental import pallas as pl
from jax.experimental.pallas import tpu as pltpu

_LANE = 128


def _round_up(x, m):
    return (x + m - 1) // m * m


def _leaky_relu(x, negative_slope=0.2):
    return jnp.where(x > 0, x, negative_slope * x)


def _make_discriminator_kernel(num_hidden):
    """Fused per-row-tile kernel: [Linear->LeakyReLU]*num_hidden -> Linear(.,1) -> Sigmoid."""

    def kernel(*refs):
        x_ref = refs[0]          # f32 (TM, packdim) streamed input tile
        o_ref = refs[-1]         # f32 (TM, 1) output column
        wb = refs[1:-1]          # (w1, b1, ..., wH, bH, w_out_row, b_out)

        x_f32 = x_ref[...]
        h_bf16 = x_f32.astype(jnp.bfloat16)      # in-kernel cast (cheap VPU op)
        feat = x_f32                              # f32 features feeding the final layer
        for l in range(num_hidden):
            w = wb[2 * l][...]                    # bf16 (in, H)  H multiple of 128
            b = wb[2 * l + 1][...]                # f32  (1, H)   padded cols are 0
            z = jnp.dot(h_bf16, w, preferred_element_type=jnp.float32) + b
            feat = _leaky_relu(z)                 # f32 math
            h_bf16 = feat.astype(jnp.bfloat16)    # bf16 for the next MXU pass
            # TODO(synk): training-mode Dropout(0.5) (random mask + 2x scale) omitted;
            #             eval-mode dropout is the identity.

        w_out = wb[-2][...]      # f32 (1, H)   row vector (transposed weight), padded cols 0
        b_out = wb[-1][...]      # f32 (1, 1)
        logit = jnp.sum(feat * w_out, axis=-1, keepdims=True) + b_out
        # Exact sigmoid (tiny (TM,1) tensor, cost negligible; avoids approx-recip error).
        o_ref[...] = (1.0 / (1.0 + jnp.exp(-logit))).astype(o_ref.dtype)

    return kernel


def make_discriminator_params(key, input_dim, dis_dims, pack):
    """Deterministic parameter init (PyTorch nn.Linear-style uniform bounds).

    Weights stored as (in_features, out_features) -- the transpose of torch's
    (out, in) layout -- so the forward computes x @ W + b directly (setup glue).
    """
    params = []
    dim = input_dim * pack
    dims = list(dis_dims) + [1]
    for out_dim in dims:
        key, kw, kb = jax.random.split(key, 3)
        bound = 1.0 / jnp.sqrt(jnp.float32(dim))
        w = jax.random.uniform(kw, (dim, out_dim), jnp.float32, -bound, bound)
        b = jax.random.uniform(kb, (1, out_dim), jnp.float32, -bound, bound)
        params.append((w, b))
        dim = out_dim
    return params


def prepare_discriminator_params(params, input_dim, pack):
    """One-time setup: pad hidden feature dims to 128 lanes, cast hidden weights to bf16.

    Padded bias columns / weight rows+cols are 0, so padded activation lanes stay
    exactly 0 through LeakyReLU and contribute nothing.  The final Linear(dim,1)
    weight is stored as an f32 row vector (1, dim_padded) for the in-kernel
    multiply+reduce; its bias is a (1,1) f32.
    """
    packdim = input_dim * pack
    prepared = []
    in_dim = packdim
    for (w, b) in params[:-1]:
        out_dim = w.shape[1]
        h = _round_up(out_dim, _LANE)
        wp = jnp.zeros((in_dim, h), jnp.bfloat16).at[: w.shape[0], :out_dim].set(
            w.astype(jnp.bfloat16))
        bp = jnp.zeros((1, h), jnp.float32).at[:, :out_dim].set(b.astype(jnp.float32))
        prepared.append((wp, bp))
        in_dim = h
    w_last, b_last = params[-1]
    w_row = jnp.zeros((1, in_dim), jnp.float32).at[0, : w_last.shape[0]].set(
        w_last[:, 0].astype(jnp.float32))
    b_out = b_last.astype(jnp.float32).reshape(1, 1)
    prepared.append((w_row, b_out))
    return prepared


def discriminator_forward(x, prepared_params, pack, *, tile_m=1024):
    """Equivalent of Discriminator.forward(input) with loss='cross_entropy'.

    `prepared_params` must come from prepare_discriminator_params (hoisted setup).
    On v6e/v5e (128 MiB VMEM) a larger tile_m (e.g. 2048) can be passed for very
    large batches; the default is v7x-safe.
    """
    n, input_dim = x.shape
    assert n % pack == 0, "batch must be divisible by pack"
    packdim = input_dim * pack
    rows = n // pack
    xp = x.reshape(rows, packdim)                    # == input.view(-1, self.packdim)

    num_hidden = len(prepared_params) - 1

    # Row tile: aim for >= 8 grid steps on large batches (2 TCs on v7x + DMA overlap),
    # capped so the double-buffered f32 input tile stays <= ~8 MiB for large packdim.
    tm = min(tile_m, _round_up(pl.cdiv(rows, 8), 8))
    vmem_cap_rows = max(8, ((8 << 20) // (2 * packdim * 4)) // 8 * 8)
    tm = max(8, min(tm, vmem_cap_rows))

    num_tiles = pl.cdiv(rows, tm)
    padded_rows = num_tiles * tm
    if padded_rows != rows:
        # Only pad when the tile does not divide the row count.
        xp = jnp.pad(xp, ((0, padded_rows - rows), (0, 0)))

    # Input row-tile streams through the pipeline; weights/biases are full blocks
    # with constant index_maps so they remain VMEM-resident across grid steps.
    in_specs = [pl.BlockSpec((tm, packdim), lambda i: (i, 0))]
    flat_params = []
    for (w, b) in prepared_params:
        in_specs.append(pl.BlockSpec(w.shape, lambda i: (0, 0)))
        in_specs.append(pl.BlockSpec(b.shape, lambda i: (0, 0)))
        flat_params += [w, b]
    out_spec = pl.BlockSpec((tm, 1), lambda i: (i, 0))

    # Explicit scoped-VMEM budget (double-buffered input/output/params + activation headroom).
    param_bytes = sum(int(w.size) * w.dtype.itemsize + int(b.size) * b.dtype.itemsize
                      for (w, b) in prepared_params)
    widths = [packdim] + [int(w.shape[1]) for (w, _) in prepared_params[:-1]]
    max_h = max(widths)
    est = 2 * tm * packdim * 4          # input tile, f32, double-buffered
    est += 2 * tm * 4                   # output column, f32, double-buffered
    est += 2 * param_bytes              # params (double-buffered by the pipeline)
    est += 6 * tm * max_h * 4           # activation temporaries headroom
    vmem_limit = int(min(64 << 20, max(2 * est, 32 << 20)))

    out = pl.pallas_call(
        _make_discriminator_kernel(num_hidden),
        out_shape=jax.ShapeDtypeStruct((padded_rows, 1), jnp.float32),
        grid=(num_tiles,),
        in_specs=in_specs,
        out_specs=out_spec,
        compiler_params=pltpu.CompilerParams(
            dimension_semantics=("parallel",),
            vmem_limit_bytes=vmem_limit),
    )(xp, *flat_params)

    return out if padded_rows == rows else out[:rows]


def discriminator_reference(x, params, pack):
    """Pure-JAX f32 reference for correctness checking."""
    n, input_dim = x.shape
    xp = x.reshape(-1, input_dim * pack)
    h = xp
    for (w, b) in params[:-1]:
        h = _leaky_relu(h @ w + b)
    w, b = params[-1]
    return jax.nn.sigmoid(h @ w + b)


if __name__ == "__main__":
    # Module hyper-parameters (small, consistent with the PyTorch __init__).
    input_dim = 16
    dis_dims = (32, 32)
    pack = 2
    batch = 64          # divisible by pack -> packed rows = 32 -> 4 grid steps of 8 rows

    key = jax.random.PRNGKey(0)
    key, kx = jax.random.split(key)
    x = jax.random.normal(kx, (batch, input_dim), jnp.float32)

    params = make_discriminator_params(key, input_dim, dis_dims, pack)
    prepared = prepare_discriminator_params(params, input_dim, pack)   # one-time setup

    out = discriminator_forward(x, prepared, pack)
    out = jax.block_until_ready(out)

    ref = discriminator_reference(x, params, pack)
    assert out.shape == (batch // pack, 1), out.shape
    # bf16 hidden weights/activations -> compare with a tolerance that comfortably
    # covers bf16 rounding while catching real bugs.
    assert jnp.allclose(out, ref, atol=2e-2, rtol=2e-2), (out, ref)

    print("KERNEL_OK")
</pallas_src>

<mosaic_0001>
module attributes {stable_mosaic.version = 11 : i64} {
  func.func @kernel(%arg0: i32, %arg1: memref<8x32xf32, #tpu.memory_space<vmem>>, %arg2: memref<32x128xbf16, #tpu.memory_space<vmem>>, %arg3: memref<1x128xf32, #tpu.memory_space<vmem>>, %arg4: memref<128x128xbf16, #tpu.memory_space<vmem>>, %arg5: memref<1x128xf32, #tpu.memory_space<vmem>>, %arg6: memref<1x128xf32, #tpu.memory_space<vmem>>, %arg7: memref<1x1xf32, #tpu.memory_space<vmem>>, %arg8: memref<8x1xf32, #tpu.memory_space<vmem>>) attributes {dimension_semantics = [#tpu.dimension_semantics<parallel>], iteration_bounds = array<i64: 4>, scalar_prefetch = 0 : i64, scratch_operands = 0 : i64, tpu.core_type = #tpu.core_type<tc>, window_params = [{transform_indices = @transform_0, window_bounds = array<i64: 8, 32>}, {pipeline_mode = #tpu.pipeline_mode<synchronous>, transform_indices = @transform_1, window_bounds = array<i64: 32, 128>}, {pipeline_mode = #tpu.pipeline_mode<synchronous>, transform_indices = @transform_2, window_bounds = array<i64: 1, 128>}, {pipeline_mode = #tpu.pipeline_mode<synchronous>, transform_indices = @transform_3, window_bounds = array<i64: 128, 128>}, {pipeline_mode = #tpu.pipeline_mode<synchronous>, transform_indices = @transform_4, window_bounds = array<i64: 1, 128>}, {pipeline_mode = #tpu.pipeline_mode<synchronous>, transform_indices = @transform_5, window_bounds = array<i64: 1, 128>}, {pipeline_mode = #tpu.pipeline_mode<synchronous>, transform_indices = @transform_6, window_bounds = array<i64: 1, 1>}, {transform_indices = @transform_7, window_bounds = array<i64: 8, 1>}]} {
    %c0 = arith.constant 0 : index
    %c0_0 = arith.constant 0 : index
    %0 = vector.load %arg1[%c0, %c0_0] : memref<8x32xf32, #tpu.memory_space<vmem>>, vector<8x32xf32>
    %1 = arith.truncf %0 : vector<8x32xf32> to vector<8x32xbf16>
    %c0_1 = arith.constant 0 : index
    %c0_2 = arith.constant 0 : index
    %2 = vector.load %arg2[%c0_1, %c0_2] : memref<32x128xbf16, #tpu.memory_space<vmem>>, vector<32x128xbf16>
    %c0_3 = arith.constant 0 : index
    %c0_4 = arith.constant 0 : index
    %3 = vector.load %arg3[%c0_3, %c0_4] : memref<1x128xf32, #tpu.memory_space<vmem>>, vector<1x128xf32>
    %cst = arith.constant dense<0.000000e+00> : vector<8x128xf32>
    %4 = tpu.matmul %1, %2, %cst {dimension_numbers = #tpu.dot_dimension_numbers<[1], [0], [0], [1], [0, 0, 1, 1], [], []>} : vector<8x32xbf16>, vector<32x128xbf16>, vector<8x128xf32> -> vector<8x128xf32>
    %5 = vector.broadcast %3 : vector<1x128xf32> to vector<8x128xf32>
    %6 = arith.addf %4, %5 : vector<8x128xf32>
    %cst_5 = arith.constant 0.000000e+00 : f32
    %7 = vector.broadcast %cst_5 : f32 to vector<8x128xf32>
    %8 = arith.cmpf ogt, %6, %7 : vector<8x128xf32>
    %cst_6 = arith.constant 2.000000e-01 : f32
    %9 = vector.broadcast %cst_6 : f32 to vector<8x128xf32>
    %10 = arith.mulf %9, %6 : vector<8x128xf32>
    %11 = arith.select %8, %6, %10 : vector<8x128xi1>, vector<8x128xf32>
    %12 = arith.truncf %11 : vector<8x128xf32> to vector<8x128xbf16>
    %c0_7 = arith.constant 0 : index
    %c0_8 = arith.constant 0 : index
    %13 = vector.load %arg4[%c0_7, %c0_8] : memref<128x128xbf16, #tpu.memory_space<vmem>>, vector<128x128xbf16>
    %c0_9 = arith.constant 0 : index
    %c0_10 = arith.constant 0 : index
    %14 = vector.load %arg5[%c0_9, %c0_10] : memref<1x128xf32, #tpu.memory_space<vmem>>, vector<1x128xf32>
    %cst_11 = arith.constant dense<0.000000e+00> : vector<8x128xf32>
    %15 = tpu.matmul %12, %13, %cst_11 {dimension_numbers = #tpu.dot_dimension_numbers<[1], [0], [0], [1], [0, 0, 1, 1], [], []>} : vector<8x128xbf16>, vector<128x128xbf16>, vector<8x128xf32> -> vector<8x128xf32>
    %16 = vector.broadcast %14 : vector<1x128xf32> to vector<8x128xf32>
    %17 = arith.addf %15, %16 : vector<8x128xf32>
    %cst_12 = arith.constant 0.000000e+00 : f32
    %18 = vector.broadcast %cst_12 : f32 to vector<8x128xf32>
    %19 = arith.cmpf ogt, %17, %18 : vector<8x128xf32>
    %cst_13 = arith.constant 2.000000e-01 : f32
    %20 = vector.broadcast %cst_13 : f32 to vector<8x128xf32>
    %21 = arith.mulf %20, %17 : vector<8x128xf32>
    %22 = arith.select %19, %17, %21 : vector<8x128xi1>, vector<8x128xf32>
    %c0_14 = arith.constant 0 : index
    %c0_15 = arith.constant 0 : index
    %23 = vector.load %arg6[%c0_14, %c0_15] : memref<1x128xf32, #tpu.memory_space<vmem>>, vector<1x128xf32>
    %c0_16 = arith.constant 0 : index
    %c0_17 = arith.constant 0 : index
    %24 = vector.load %arg7[%c0_16, %c0_17] : memref<1x1xf32, #tpu.memory_space<vmem>>, vector<1x1xf32>
    %25 = vector.broadcast %23 : vector<1x128xf32> to vector<8x128xf32>
    %26 = arith.mulf %22, %25 : vector<8x128xf32>
    %cst_18 = arith.constant dense<0.000000e+00> : vector<8xf32>
    %27 = vector.multi_reduction <add>, %26, %cst_18 [1] : vector<8x128xf32> to vector<8xf32>
    %28 = vector.shape_cast %27 : vector<8xf32> to vector<8x1xf32>
    %29 = vector.broadcast %24 : vector<1x1xf32> to vector<8x1xf32>
    %30 = arith.addf %28, %29 : vector<8x1xf32>
    %cst_19 = arith.constant 0.000000e+00 : f32
    %31 = vector.broadcast %cst_19 : f32 to vector<8x1xf32>
    %32 = arith.subf %31, %30 : vector<8x1xf32>
    %33 = math.exp %32 : vector<8x1xf32>
    %cst_20 = arith.constant 1.000000e+00 : f32
    %34 = vector.broadcast %cst_20 : f32 to vector<8x1xf32>
    %35 = arith.addf %34, %33 : vector<8x1xf32>
    %cst_21 = arith.constant 1.000000e+00 : f32
    %36 = vector.broadcast %cst_21 : f32 to vector<8x1xf32>
    %37 = arith.divf %36, %35 : vector<8x1xf32>
    %c0_22 = arith.constant 0 : index
    %c0_23 = arith.constant 0 : index
    %38 = vector.load %arg8[%c0_22, %c0_23] : memref<8x1xf32, #tpu.memory_space<vmem>>, vector<8x1xf32>
    tpu.vector_store %arg8[%c0_22, %c0_23], %37 {strides = array<i32>} : memref<8x1xf32, #tpu.memory_space<vmem>>, vector<8x1xf32>,
    return
  }
  func.func @transform_0(%arg0: i32) -> (i32, i32) {
    %c0_i32 = arith.constant 0 : i32
    %c0_i32_0 = arith.constant 0 : i32
    return %arg0, %c0_i32 : i32, i32
  }
  func.func @transform_1(%arg0: i32) -> (i32, i32) {
    %c0_i32 = arith.constant 0 : i32
    %c0_i32_0 = arith.constant 0 : i32
    %c0_i32_1 = arith.constant 0 : i32
    return %c0_i32, %c0_i32_0 : i32, i32
  }
  func.func @transform_2(%arg0: i32) -> (i32, i32) {
    %c0_i32 = arith.constant 0 : i32
    %c0_i32_0 = arith.constant 0 : i32
    %c0_i32_1 = arith.constant 0 : i32
    return %c0_i32, %c0_i32_0 : i32, i32
  }
  func.func @transform_3(%arg0: i32) -> (i32, i32) {
    %c0_i32 = arith.constant 0 : i32
    %c0_i32_0 = arith.constant 0 : i32
    %c0_i32_1 = arith.constant 0 : i32
    return %c0_i32, %c0_i32_0 : i32, i32
  }
  func.func @transform_4(%arg0: i32) -> (i32, i32) {
    %c0_i32 = arith.constant 0 : i32
    %c0_i32_0 = arith.constant 0 : i32
    %c0_i32_1 = arith.constant 0 : i32
    return %c0_i32, %c0_i32_0 : i32, i32
  }
  func.func @transform_5(%arg0: i32) -> (i32, i32) {
    %c0_i32 = arith.constant 0 : i32
    %c0_i32_0 = arith.constant 0 : i32
    %c0_i32_1 = arith.constant 0 : i32
    return %c0_i32, %c0_i32_0 : i32, i32
  }
  func.func @transform_6(%arg0: i32) -> (i32, i32) {
    %c0_i32 = arith.constant 0 : i32
    %c0_i32_0 = arith.constant 0 : i32
    %c0_i32_1 = arith.constant 0 : i32
    return %c0_i32, %c0_i32_0 : i32, i32
  }
  func.func @transform_7(%arg0: i32) -> (i32, i32) {
    %c0_i32 = arith.constant 0 : i32
    %c0_i32_0 = arith.constant 0 : i32
    return %arg0, %c0_i32 : i32, i32
  }
}

</mosaic_0001>

<llo_original>
// kernel: tpu_custom_call.1
$region0: #{tpu_custom_call.1}
  #allocation0 [shape = 'u32[]', space=smem, size = 0x4, offset = 0x4, fixed_abs, tag = 'smem constant byte address 0x4 - core index']
  #allocation1 [shape = 'u32[144,128]{1,0:T(1,128)}', space=vmem, size = 0x12000, scoped, tag = 'internal scratch']
  #allocation2 [shape = 'f32[1,1]{1,0:T(1,128)S(1)}', space=vmem, size = 0x200, scoped, tag = 'scoped memory for tpu_custom_call.1']
  %s0 = inlined_call_operand.hbm [shape: f32[32,32], index: 0, kind: input, shape index: {}]
  %s1 = inlined_call_operand.hbm [shape: bf16[32,128], index: 1, kind: input, shape index: {}]
  %s2 = inlined_call_operand.vmem [shape: f32[1,128], index: 2, kind: input, shape index: {}]
  %s3 = inlined_call_operand.hbm [shape: bf16[128,128], index: 3, kind: input, shape index: {}]
  %s4 = inlined_call_operand.vmem [shape: f32[1,128], index: 4, kind: input, shape index: {}]
  %s5 = inlined_call_operand.vmem [shape: f32[1,128], index: 5, kind: input, shape index: {}]
  %s6 = inlined_call_operand.<no memory space> [shape: f32[1,1], index: 6, kind: input, shape index: {}]
  %s7 = inlined_call_operand.vmem [shape: f32[32,1], index: 7, kind: output, shape index: {}]
  %s8 = sld [smem:[#allocation0]]
  $region73: #{tpu_custom_call.1} parent=0
    _
  %s10 = ssub.s32 1, %s8
  %s11 = scalar_select 0, %s10, %s8
  %v12 = vstv %s6
  %13 = vst [vmem:[#allocation2] sm:$0x1] %v12
  $region1: #{tpu_custom_call.1} parent=0
    #allocation3 [shape = 'u8[8192]{0}', space=vmem, size = 0x2000, scoped, tag = 'input window, operand 0']
    #allocation4 [shape = 's32[2]{0}', space=sflag, size = 0x8, scoped, tag = 'scoped memory for tpu_custom_call.1']
    #allocation5 [shape = 'u8[8192]{0}', space=vmem, size = 0x2000, scoped, tag = 'input window, operand 1, single buffered']
    #allocation6 [shape = 's32[1]{0}', space=sflag, size = 0x4, scoped, tag = 'scoped memory for tpu_custom_call.1']
    #allocation7 [shape = 'u8[32768]{0}', space=vmem, size = 0x8000, scoped, tag = 'input window, operand 3, single buffered']
    %14 = vsyncpa [#allocation4], 0
    %s15 = scalar_lea.sflag [#allocation4], 1
    %16 = vsyncpa %s15, 0
    %17 = vsyncpa [#allocation6], 0
    loop: start=0, step=1, limit=6
    $region2: #{tpu_custom_call.1} parent=1 // loop_pre_header
      _
    $region3: #{tpu_custom_call.1} parent=1 // loop_header
      %s19 = sphi 0, %s23
      %p20 = scmp.ge.s32.totalorder %s19, 6
      %s29 = sphi 0, %s31
      %s32 = sphi 0, %s29
      %s33 = sphi 0, %s32
      %s49 = sphi 0, %s33
      %s53 = sphi 0, %s53
      %s55 = sphi 0, %s53
      %s56 = sphi 0, %s55
      %s70 = sphi 0, %s56
      %s74 = sphi 0, %s74
      %s76 = sphi 0, %s74
      %s77 = sphi 0, %s76
      %s91 = sphi 0, %s77
      %s95 = sphi 0, %s95
      %s97 = sphi 0, %s95
      %s98 = sphi 0, %s97
      %s112 = sphi 0, %s98
      %s116 = sphi 0, %s116
      %s118 = sphi 0, %s116
      %s119 = sphi 0, %s118
      %s133 = sphi 0, %s119
      %s137 = sphi 0, %s137
      %s139 = sphi 0, %s137
      %s140 = sphi 0, %s139
      %s154 = sphi 0, %s140
      %s158 = sphi 0, %s158
      %s160 = sphi 0, %s158
      %s161 = sphi 0, %s160
      %s175 = sphi 0, %s161
      %s181 = sphi 0, %s183
      %s184 = sphi 0, %s181
      %s185 = sphi 0, %s184
      %s201 = sphi 0, %s185
    $region4: #{tpu_custom_call.1} parent=1 // loop_header_branch
      %22 = sbr.rel (%p20) target = $region8
    $region5: #{tpu_custom_call.1} parent=1 // loop_body
      %s24 = ssub.s32 %s19, 1
      %s25 = ssub.s32 %s19, 2
      %s26 = sadd.s32 %s19, 1
      %s27 = ssub.s32 %s19, %s26
      %p28 = scmp.eq.s32.totalorder %s27, 0
      %s30 = sadd.s32 %s29, 1
      %s31 = scalar_select %p28, %s29, %s30
      %p34 = pneg %p28
      %p35 = scmp.eq.s32.totalorder %s19, 3
      %p36 = por %p34, %p35
      %p37 = scmp.ne.s32.totalorder %s29, %s32
      %p38 = scmp.eq.s32.totalorder %s19, 0
      %p39 = por %p37, %p38
      %p40 = scmp.ne.s32.totalorder %s29, %s32
      %p41 = scmp.eq.s32.totalorder %s24, 3
      %p42 = por %p40, %p41
      %p43 = scmp.ne.s32.totalorder %s32, %s33
      %p44 = scmp.eq.s32.totalorder %s24, 0
      %p45 = por %p43, %p44
      %p46 = scmp.ne.s32.totalorder %s32, %s33
      %p47 = scmp.eq.s32.totalorder %s25, 3
      %p48 = por %p46, %p47
      %p50 = scmp.ne.s32.totalorder %s33, %s49
      %p51 = scmp.eq.s32.totalorder %s25, 0
      %p52 = por %p50, %p51
      %s54 = sadd.s32 %s53, 1
      %p57 = scmp.eq.s32.totalorder %s19, 3
      %p58 = scmp.ne.s32.totalorder %s53, %s55
      %p59 = scmp.eq.s32.totalorder %s19, 0
      %p60 = por %p58, %p59
      %p61 = scmp.ne.s32.totalorder %s53, %s55
      %p62 = scmp.eq.s32.totalorder %s24, 3
      %p63 = por %p61, %p62
      %p64 = scmp.ne.s32.totalorder %s55, %s56
      %p65 = scmp.eq.s32.totalorder %s24, 0
      %p66 = por %p64, %p65
      %p67 = scmp.ne.s32.totalorder %s55, %s56
      %p68 = scmp.eq.s32.totalorder %s25, 3
      %p69 = por %p67, %p68
      %p71 = scmp.ne.s32.totalorder %s56, %s70
      %p72 = scmp.eq.s32.totalorder %s25, 0
      %p73 = por %p71, %p72
      %s75 = sadd.s32 %s74, 1
      %p78 = scmp.eq.s32.totalorder %s19, 3
      %p79 = scmp.ne.s32.totalorder %s74, %s76
      %p80 = scmp.eq.s32.totalorder %s19, 0
      %p81 = por %p79, %p80
      %p82 = scmp.ne.s32.totalorder %s74, %s76
      %p83 = scmp.eq.s32.totalorder %s24, 3
      %p84 = por %p82, %p83
      %p85 = scmp.ne.s32.totalorder %s76, %s77
      %p86 = scmp.eq.s32.totalorder %s24, 0
      %p87 = por %p85, %p86
      %p88 = scmp.ne.s32.totalorder %s76, %s77
      %p89 = scmp.eq.s32.totalorder %s25, 3
      %p90 = por %p88, %p89
      %p92 = scmp.ne.s32.totalorder %s77, %s91
      %p93 = scmp.eq.s32.totalorder %s25, 0
      %p94 = por %p92, %p93
      %s96 = sadd.s32 %s95, 1
      %p99 = scmp.eq.s32.totalorder %s19, 3
      %p100 = scmp.ne.s32.totalorder %s95, %s97
      %p101 = scmp.eq.s32.totalorder %s19, 0
      %p102 = por %p100, %p101
      %p103 = scmp.ne.s32.totalorder %s95, %s97
      %p104 = scmp.eq.s32.totalorder %s24, 3
      %p105 = por %p103, %p104
      %p106 = scmp.ne.s32.totalorder %s97, %s98
      %p107 = scmp.eq.s32.totalorder %s24, 0
      %p108 = por %p106, %p107
      %p109 = scmp.ne.s32.totalorder %s97, %s98
      %p110 = scmp.eq.s32.totalorder %s25, 3
      %p111 = por %p109, %p110
      %p113 = scmp.ne.s32.totalorder %s98, %s112
      %p114 = scmp.eq.s32.totalorder %s25, 0
      %p115 = por %p113, %p114
      %s117 = sadd.s32 %s116, 1
      %p120 = scmp.eq.s32.totalorder %s19, 3
      %p121 = scmp.ne.s32.totalorder %s116, %s118
      %p122 = scmp.eq.s32.totalorder %s19, 0
      %p123 = por %p121, %p122
      %p124 = scmp.ne.s32.totalorder %s116, %s118
      %p125 = scmp.eq.s32.totalorder %s24, 3
      %p126 = por %p124, %p125
      %p127 = scmp.ne.s32.totalorder %s118, %s119
      %p128 = scmp.eq.s32.totalorder %s24, 0
      %p129 = por %p127, %p128
      %p130 = scmp.ne.s32.totalorder %s118, %s119
      %p131 = scmp.eq.s32.totalorder %s25, 3
      %p132 = por %p130, %p131
      %p134 = scmp.ne.s32.totalorder %s119, %s133
      %p135 = scmp.eq.s32.totalorder %s25, 0
      %p136 = por %p134, %p135
      %s138 = sadd.s32 %s137, 1
      %p141 = scmp.eq.s32.totalorder %s19, 3
      %p142 = scmp.ne.s32.totalorder %s137, %s139
      %p143 = scmp.eq.s32.totalorder %s19, 0
      %p144 = por %p142, %p143
      %p145 = scmp.ne.s32.totalorder %s137, %s139
      %p146 = scmp.eq.s32.totalorder %s24, 3
      %p147 = por %p145, %p146
      %p148 = scmp.ne.s32.totalorder %s139, %s140
      %p149 = scmp.eq.s32.totalorder %s24, 0
      %p150 = por %p148, %p149
      %p151 = scmp.ne.s32.totalorder %s139, %s140
      %p152 = scmp.eq.s32.totalorder %s25, 3
      %p153 = por %p151, %p152
      %p155 = scmp.ne.s32.totalorder %s140, %s154
      %p156 = scmp.eq.s32.totalorder %s25, 0
      %p157 = por %p155, %p156
      %s159 = sadd.s32 %s158, 1
      %p162 = scmp.eq.s32.totalorder %s19, 3
      %p163 = scmp.ne.s32.totalorder %s158, %s160
      %p164 = scmp.eq.s32.totalorder %s19, 0
      %p165 = por %p163, %p164
      %p166 = scmp.ne.s32.totalorder %s158, %s160
      %p167 = scmp.eq.s32.totalorder %s24, 3
      %p168 = por %p166, %p167
      %p169 = scmp.ne.s32.totalorder %s160, %s161
      %p170 = scmp.eq.s32.totalorder %s24, 0
      %p171 = por %p169, %p170
      %p172 = scmp.ne.s32.totalorder %s160, %s161
      %p173 = scmp.eq.s32.totalorder %s25, 3
      %p174 = por %p172, %p173
      %p176 = scmp.ne.s32.totalorder %s161, %s175
      %p177 = scmp.eq.s32.totalorder %s25, 0
      %p178 = por %p176, %p177
      %s179 = ssub.s32 %s19, %s26
      %p180 = scmp.eq.s32.totalorder %s179, 0
      %s182 = sadd.s32 %s181, 1
      %s183 = scalar_select %p180, %s181, %s182
      %p186 = pneg %p180
      %p187 = scmp.eq.s32.totalorder %s19, 3
      %p188 = por %p186, %p187
      %p189 = scmp.ne.s32.totalorder %s181, %s184
      %p190 = scmp.eq.s32.totalorder %s19, 0
      %p191 = por %p189, %p190
      %p192 = scmp.ne.s32.totalorder %s181, %s184
      %p193 = scmp.eq.s32.totalorder %s24, 3
      %p194 = por %p192, %p193
      %p195 = scmp.ne.s32.totalorder %s184, %s185
      %p196 = scmp.eq.s32.totalorder %s24, 0
      %p197 = por %p195, %p196
      %p198 = scmp.ne.s32.totalorder %s184, %s185
      %p199 = scmp.eq.s32.totalorder %s25, 3
      %p200 = por %p198, %p199
      %p202 = scmp.ne.s32.totalorder %s185, %s201
      %p203 = scmp.eq.s32.totalorder %s25, 0
      %p204 = por %p202, %p203
      %p205 = scmp.le.s32.totalorder 1, %s19
      %p206 = scmp.lt.s32.totalorder %s19, 5
      %p207 = pnand %p205, %p206
      %p208 = pneg %p207
      // Predicated region
      $region9: #{tpu_custom_call.1} parent=5 // pred_check
        _
      $region10: #{tpu_custom_call.1} parent=5 // pred_check_branch
        %210 = sbr.rel (%p207) target = $region12
      $region11: #{tpu_custom_call.1} parent=5 // pred_region
        %s211 = ssub.s32 %s19, 1
        // Predicated region
        $region13: #{tpu_custom_call.1} parent=11 // pred_check
          %p212 = pneg %p66
        $region14: #{tpu_custom_call.1} parent=11 // pred_check_branch
          %214 = sbr.rel (%p212) target = $region16
        $region15: #{tpu_custom_call.1} parent=11 // pred_region
          %s216 = ssub.s32 256, 256
          %217 = vsyncadd [#allocation6], %s216
          %s218 = sshll.u32 [#allocation5], 4
          %s219 = int_to_ptr.vmem [resolvable:$true] %s218
          %224 = dma.hbm_to_vmem [thread:$0]  %s1, 256, %s219, [#allocation6], 64, 64, 4
        $region16: #{tpu_custom_call.1} parent=11 // pred_fallthru
          _
        // Predicated region
        $region17: #{tpu_custom_call.1} parent=11 // pred_check
          %p225 = pneg %p87
        $region18: #{tpu_custom_call.1} parent=11 // pred_check_branch
          %227 = sbr.rel (%p225) target = $region20
        $region19: #{tpu_custom_call.1} parent=11 // pred_region
          _
        $region20: #{tpu_custom_call.1} parent=11 // pred_fallthru
          _
        // Predicated region
        $region21: #{tpu_custom_call.1} parent=11 // pred_check
          %p228 = pneg %p108
        $region22: #{tpu_custom_call.1} parent=11 // pred_check_branch
          %230 = sbr.rel (%p228) target = $region24
        $region23: #{tpu_custom_call.1} parent=11 // pred_region
          %s232 = ssub.s32 1024, 1024
          %233 = vsyncadd [#allocation6], %s232
          %s234 = sshll.u32 [#allocation7], 4
          %s235 = int_to_ptr.vmem [resolvable:$true] %s234
          %240 = dma.hbm_to_vmem [thread:$0]  %s3, 1024, %s235, [#allocation6], 64, 64, 4
        $region24: #{tpu_custom_call.1} parent=11 // pred_fallthru
          _
        // Predicated region
        $region25: #{tpu_custom_call.1} parent=11 // pred_check
          %p241 = pneg %p129
        $region26: #{tpu_custom_call.1} parent=11 // pred_check_branch
          %243 = sbr.rel (%p241) target = $region28
        $region27: #{tpu_custom_call.1} parent=11 // pred_region
          _
        $region28: #{tpu_custom_call.1} parent=11 // pred_fallthru
          _
        // Predicated region
        $region29: #{tpu_custom_call.1} parent=11 // pred_check
          %p244 = pneg %p150
        $region30: #{tpu_custom_call.1} parent=11 // pred_check_branch
          %246 = sbr.rel (%p244) target = $region32
        $region31: #{tpu_custom_call.1} parent=11 // pred_region
          _
        $region32: #{tpu_custom_call.1} parent=11 // pred_fallthru
          _
        // Predicated region
        $region33: #{tpu_custom_call.1} parent=11 // pred_check
          %p247 = pneg %p171
        $region34: #{tpu_custom_call.1} parent=11 // pred_check_branch
          %249 = sbr.rel (%p247) target = $region36
        $region35: #{tpu_custom_call.1} parent=11 // pred_region
          _
        $region36: #{tpu_custom_call.1} parent=11 // pred_fallthru
          _
      $region12: #{tpu_custom_call.1} parent=5 // pred_fallthru
        _
      %p250 = scmp.lt.s32.totalorder %s19, 4
      // Predicated region
      $region37: #{tpu_custom_call.1} parent=5 // pred_check
        %p251 = pneg %p250
      $region38: #{tpu_custom_call.1} parent=5 // pred_check_branch
        %253 = sbr.rel (%p251) target = $region40
      $region39: #{tpu_custom_call.1} parent=5 // pred_region
        // Predicated region
        $region41: #{tpu_custom_call.1} parent=39 // pred_check
          %p254 = pneg %p39
        $region42: #{tpu_custom_call.1} parent=39 // pred_check_branch
          %256 = sbr.rel (%p254) target = $region44
        $region43: #{tpu_custom_call.1} parent=39 // pred_region
          %s257 = sand.u32 %s29, 1
          %s258 = scalar_lea.sflag [#allocation4], %s257
          %s259 = sand.u32 %s29, 1
          %s260 = smul.addr %s259, 8
          %s261 = scalar_lea.vmem [#allocation3], %s260
          %s263 = ssub.s32 128, 128
          %264 = vsyncadd %s258, %s263
          %s265 = smul.addr %s19, 128
          %s266 = scalar_lea.hbm %s0, %s265
          %s268 = sshll.u32 %s261, 4
          %s269 = int_to_ptr.vmem [resolvable:$true] %s268
          %271 = dma.hbm_to_vmem [thread:$0]  %s266, 128, %s269, %s258
        $region44: #{tpu_custom_call.1} parent=39 // pred_fallthru
          _
      $region40: #{tpu_custom_call.1} parent=5 // pred_fallthru
        _
      %p272 = scmp.le.s32.totalorder 1, %s19
      %p273 = scmp.lt.s32.totalorder %s19, 5
      %p274 = pnand %p272, %p273
      %p275 = pneg %p274
      // Predicated region
      $region45: #{tpu_custom_call.1} parent=5 // pred_check
        _
      $region46: #{tpu_custom_call.1} parent=5 // pred_check_branch
        %277 = sbr.rel (%p274) target = $region48
      $region47: #{tpu_custom_call.1} parent=5 // pred_region
        %s278 = ssub.s32 %s19, 1
        %s279 = sand.u32 %s32, 1
        %s280 = scalar_lea.sflag [#allocation4], %s279
        %s281 = sand.u32 %s32, 1
        %s282 = smul.addr %s281, 8
        %s283 = scalar_lea.vmem [#allocation3], %s282
        // Predicated region
        $region49: #{tpu_custom_call.1} parent=47 // pred_check
          %p284 = pneg %p45
        $region50: #{tpu_custom_call.1} parent=47 // pred_check_branch
          %286 = sbr.rel (%p284) target = $region52
        $region51: #{tpu_custom_call.1} parent=47 // pred_region
          %287 = dma.done %s280, 128
        $region52: #{tpu_custom_call.1} parent=47 // pred_fallthru
          _
        // Predicated region
        $region53: #{tpu_custom_call.1} parent=47 // pred_check
          %p288 = pneg %p66
        $region54: #{tpu_custom_call.1} parent=47 // pred_check_branch
          %290 = sbr.rel (%p288) target = $region56
        $region55: #{tpu_custom_call.1} parent=47 // pred_region
          %291 = dma.done [#allocation6], 256
        $region56: #{tpu_custom_call.1} parent=47 // pred_fallthru
          _
        // Predicated region
        $region57: #{tpu_custom_call.1} parent=47 // pred_check
          %p292 = pneg %p108
        $region58: #{tpu_custom_call.1} parent=47 // pred_check_branch
          %294 = sbr.rel (%p292) target = $region60
        $region59: #{tpu_custom_call.1} parent=47 // pred_region
          %295 = dma.done [#allocation6], 1024
        $region60: #{tpu_custom_call.1} parent=47 // pred_fallthru
          _
        %s296 = sand.u32 %s32, 1
        %s297 = scalar_lea.sflag [#allocation4], %s296
        %s298 = sand.u32 %s32, 1
        %s299 = smul.addr %s298, 8
        %s300 = scalar_lea.vmem [#allocation3], %s299
        %p301 = pneg %p45
        %p302 = pneg %p42
        %p303 = pneg %p66
        %p304 = pneg %p63
        %p305 = pneg %p87
        %p306 = pneg %p84
        %p307 = pneg %p108
        %p308 = pneg %p105
        %p309 = pneg %p129
        %p310 = pneg %p126
        %p311 = pneg %p150
        %p312 = pneg %p147
        %p313 = pneg %p171
        %p314 = pneg %p168
        %p315 = pneg %p197
        %p316 = pneg %p194
        %p317 = scmp.lt.s32.totalorder %s24, 3
        %s318 = scalar_select %p317, %s24, 3
        %s319 = smul.addr %s318, 8
        %s320 = scalar_lea.vmem %s7, %s319
        %p321 = scmp.lt.s32.totalorder %s24, 3
        %s322 = scalar_select %p321, %s24, 3
        %s323 = smul.addr %s322, 8
        %s324 = scalar_lea.vmem %s7, %s323
        %v326 = vld [vmem:[%s283] sm:$0xff]
        %v327 = vpack.c.bf16 %v326, %v326
        %v328 = vld [vmem:[#allocation5] sm:$0xf]
        %v329 = vld [vmem:[#allocation5 + $0x4] sm:$0xf]
        %v330 = vld [vmem:[#allocation5 + $0x8] sm:$0xf]
        %v331 = vld [vmem:[#allocation5 + $0xc] sm:$0xf]
        %v332 = vld [vmem:[%s2] sm:$0x1]
        %v334 = vlaneseq
        %v335 = vshrl.u32 %v334, 7
        %v336 = vsub.s32 0, %v335
        %v337 = vrot.slane %v332, %v336
        %v343 = vunpack.c.l.b16 %v328
        %v344 = vunpack.c.l.b16 %v329
        %v345 = vunpack.c.l.b16 %v330
        %v346 = vunpack.c.l.b16 %v331
        %v347 = vpack.c.b16 %v344, %v343
        %v348 = vpack.c.b16 %v346, %v345
        %vm351 = vcmask 261120
        %v353 = vsel %vm351, %v327, 0
        %355 = vmatprep.subr.bf16.mxu0 0
        %356 = vmatpush1.bf16.msra.mxu0 %v347
        %357 = vmatprep.subr.bf16.mxu0 0
        %358 = vmatpush1.bf16.msra.mxu0 %v348
        %359 = vmatprep.subr.bf16.mxu0 0
        %360 = vmatpush1.bf16.msra.mxu0 0
        %361 = vmatprep.subr.bf16.mxu0 0
        %362 = vmatpush1.bf16.msra.mxu0 0
        %363 = vmatprep.subr.bf16.mxu0 0
        %364 = vmatpush1.bf16.msra.mxu0 0
        %365 = vmatprep.subr.bf16.mxu0 0
        %366 = vmatpush1.bf16.msra.mxu0 0
        %367 = vmatprep.subr.bf16.mxu0 0
        %368 = vmatpush1.bf16.msra.mxu0 0
        %369 = vmatprep.subr.bf16.mxu0 0
        %370 = vmatpush1.bf16.msra.mxu0 0
        %371 = vmatprep.subr.bf16.mxu0 0
        %372 = vmatpush1.bf16.msra.mxu0 0
        %373 = vmatprep.subr.bf16.mxu0 0
        %374 = vmatpush1.bf16.msra.mxu0 0
        %375 = vmatprep.subr.bf16.mxu0 0
        %376 = vmatpush1.bf16.msra.mxu0 0
        %377 = vmatprep.subr.bf16.mxu0 0
        %378 = vmatpush1.bf16.msra.mxu0 0
        %379 = vmatprep.subr.bf16.mxu0 0
        %380 = vmatpush1.bf16.msra.mxu0 0
        %381 = vmatprep.subr.bf16.mxu0 0
        %382 = vmatpush1.bf16.msra.mxu0 0
        %383 = vmatprep.subr.bf16.mxu0 0
        %384 = vmatpush1.bf16.msra.mxu0 0
        %385 = vmatprep.subr.bf16.mxu0 0
        %386 = vmatpush1.bf16.msra.mxu0 0
        %387 = vmatprep.mubr.bf16.mxu0 0
        %388 = vmatmul.mubr.bf16.gmra.mrb[0].mxu0 %v353
        %v389 = vpop.f32.mrb[0].mxu0
        %v390 = vadd.f32 %v337, %v389
        %v391 = vpop.f32.mrb[0].mxu0
        %v392 = vpop.f32.mrb[0].mxu0
        %v393 = vpop.f32.mrb[0].mxu0
        %394 = vdwg.mxu0
        %vm395 = vcmp.gt.f32.partialorder %v390, 0.0
        %v396 = vmul.f32 %v390, 0.2
        %v397 = vsel %vm395, %v390, %v396
        %v398 = vpack.c.bf16 %v397, %v397
        %v399 = vld [vmem:[#allocation7] sm:$0xf]
        %v400 = vld [vmem:[#allocation7 + $0x4] sm:$0xf]
        %v401 = vld [vmem:[#allocation7 + $0x8] sm:$0xf]
        %v402 = vld [vmem:[#allocation7 + $0xc] sm:$0xf]
        %v403 = vld [vmem:[#allocation7 + $0x10] sm:$0xf]
        %v404 = vld [vmem:[#allocation7 + $0x14] sm:$0xf]
        %v405 = vld [vmem:[#allocation7 + $0x18] sm:$0xf]
        %v406 = vld [vmem:[#allocation7 + $0x1c] sm:$0xf]
        %v407 = vld [vmem:[#allocation7 + $0x20] sm:$0xf]
        %v408 = vld [vmem:[#allocation7 + $0x24] sm:$0xf]
        %v409 = vld [vmem:[#allocation7 + $0x28] sm:$0xf]
        %v410 = vld [vmem:[#allocation7 + $0x2c] sm:$0xf]
        %v411 = vld [vmem:[#allocation7 + $0x30] sm:$0xf]
        %v412 = vld [vmem:[#allocation7 + $0x34] sm:$0xf]
        %v413 = vld [vmem:[#allocation7 + $0x38] sm:$0xf]
        %v414 = vld [vmem:[#allocation7 + $0x3c] sm:$0xf]
        %v415 = vld [vmem:[%s4] sm:$0x1]
        %v417 = vlaneseq
        %v418 = vshrl.u32 %v417, 7
        %v419 = vsub.s32 0, %v418
        %v420 = vrot.slane %v415, %v419
        %v438 = vunpack.c.l.b16 %v399
        %v439 = vunpack.c.l.b16 %v400
        %v440 = vunpack.c.l.b16 %v401
        %v441 = vunpack.c.l.b16 %v402
        %v442 = vunpack.c.l.b16 %v403
        %v443 = vunpack.c.l.b16 %v404
        %v444 = vunpack.c.l.b16 %v405
        %v445 = vunpack.c.l.b16 %v406
        %v446 = vunpack.c.l.b16 %v407
        %v447 = vunpack.c.l.b16 %v408
        %v448 = vunpack.c.l.b16 %v409
        %v449 = vunpack.c.l.b16 %v410
        %v450 = vunpack.c.l.b16 %v411
        %v451 = vunpack.c.l.b16 %v412
        %v452 = vunpack.c.l.b16 %v413
        %v453 = vunpack.c.l.b16 %v414
        %v454 = vpack.c.b16 %v439, %v438
        %v455 = vpack.c.b16 %v441, %v440
        %v456 = vpack.c.b16 %v443, %v442
        %v457 = vpack.c.b16 %v445, %v444
        %v458 = vpack.c.b16 %v447, %v446
        %v459 = vpack.c.b16 %v449, %v448
        %v460 = vpack.c.b16 %v451, %v450
        %v461 = vpack.c.b16 %v453, %v452
        %470 = vmatprep.subr.bf16.mxu0 0
        %471 = vmatpush1.bf16.msra.mxu0 %v454
        %472 = vmatprep.subr.bf16.mxu0 0
        %473 = vmatpush1.bf16.msra.mxu0 %v455
        %474 = vmatprep.subr.bf16.mxu0 0
        %475 = vmatpush1.bf16.msra.mxu0 %v456
        %476 = vmatprep.subr.bf16.mxu0 0
        %477 = vmatpush1.bf16.msra.mxu0 %v457
        %478 = vmatprep.subr.bf16.mxu0 0
        %479 = vmatpush1.bf16.msra.mxu0 %v458
        %480 = vmatprep.subr.bf16.mxu0 0
        %481 = vmatpush1.bf16.msra.mxu0 %v459
        %482 = vmatprep.subr.bf16.mxu0 0
        %483 = vmatpush1.bf16.msra.mxu0 %v460
        %484 = vmatprep.subr.bf16.mxu0 0
        %485 = vmatpush1.bf16.msra.mxu0 %v461
        %486 = vmatprep.subr.bf16.mxu0 0
        %487 = vmatpush1.bf16.msra.mxu0 0
        %488 = vmatprep.subr.bf16.mxu0 0
        %489 = vmatpush1.bf16.msra.mxu0 0
        %490 = vmatprep.subr.bf16.mxu0 0
        %491 = vmatpush1.bf16.msra.mxu0 0
        %492 = vmatprep.subr.bf16.mxu0 0
        %493 = vmatpush1.bf16.msra.mxu0 0
        %494 = vmatprep.subr.bf16.mxu0 0
        %495 = vmatpush1.bf16.msra.mxu0 0
        %496 = vmatprep.subr.bf16.mxu0 0
        %497 = vmatpush1.bf16.msra.mxu0 0
        %498 = vmatprep.subr.bf16.mxu0 0
        %499 = vmatpush1.bf16.msra.mxu0 0
        %500 = vmatprep.subr.bf16.mxu0 0
        %501 = vmatpush1.bf16.msra.mxu0 0
        %502 = vmatprep.mubr.bf16.mxu0 0
        %503 = vmatmul.mubr.bf16.gmra.mrb[0].mxu0 %v398
        %v504 = vpop.f32.mrb[0].mxu0
        %v505 = vadd.f32 %v420, %v504
        %v506 = vpop.f32.mrb[0].mxu0
        %v507 = vpop.f32.mrb[0].mxu0
        %v508 = vpop.f32.mrb[0].mxu0
        %509 = vdwg.mxu0
        %vm510 = vcmp.gt.f32.partialorder %v505, 0.0
        %v511 = vmul.f32 %v505, 0.2
        %v512 = vsel %vm510, %v505, %v511
        %v513 = vld [vmem:[%s5] sm:$0x1]
        %v514 = vld [vmem:[#allocation2] sm:$0x1]
        %v516 = vlaneseq
        %v517 = vshrl.u32 %v516, 7
        %v518 = vsub.s32 0, %v517
        %v519 = vrot.slane %v513, %v518
        %v521 = vmul.f32 %v512, %v519
        %522 = vadd.xlane.f32.xlu0 %v521
        %v523 = vpop.xlane.xlu0 %522
        %v525 = vlaneseq
        %v526 = vshrl.u32 %v525, 7
        %v527 = vsub.s32 0, %v526
        %v528 = vrot.slane %v514, %v527
        %v530 = vadd.f32 %v523, %v528
        %v531 = vsub.f32 0.0, %v530
        %v532 = vmul.f32 %v531, 1.442695
        %v533 = vpow.pop %v532
        %v534 = vadd.f32 %v533, 1.0
        %v535 = vrcp.pop %v534
        %v536 = vmul.f32 1.0, %v535
        %vm537 = vcmask 7168
        %538 = vst.msk [vmem:[%s324] sm:$0xff] %vm537, %v536
        %p539 = scmp.lt.s32.totalorder %s24, 3
        %s540 = scalar_select %p539, %s24, 3
        %s541 = smul.addr %s540, 8
        %s542 = scalar_lea.vmem %s7, %s541
        // Predicated region
        $region61: #{tpu_custom_call.1} parent=47 // pred_check
          %p543 = pneg %p194
        $region62: #{tpu_custom_call.1} parent=47 // pred_check_branch
          %545 = sbr.rel (%p543) target = $region64
        $region63: #{tpu_custom_call.1} parent=47 // pred_region
          _
        $region64: #{tpu_custom_call.1} parent=47 // pred_fallthru
          _
      $region48: #{tpu_custom_call.1} parent=5 // pred_fallthru
        _
      %p546 = scmp.le.s32.totalorder 2, %s19
      // Predicated region
      $region65: #{tpu_custom_call.1} parent=5 // pred_check
        %p547 = pneg %p546
      $region66: #{tpu_custom_call.1} parent=5 // pred_check_branch
        %549 = sbr.rel (%p547) target = $region68
      $region67: #{tpu_custom_call.1} parent=5 // pred_region
        %s550 = ssub.s32 %s19, 2
        // Predicated region
        $region69: #{tpu_custom_call.1} parent=67 // pred_check
          %p551 = pneg %p200
        $region70: #{tpu_custom_call.1} parent=67 // pred_check_branch
          %553 = sbr.rel (%p551) target = $region72
        $region71: #{tpu_custom_call.1} parent=67 // pred_region
          %p554 = scmp.lt.s32.totalorder %s25, 3
          %s555 = scalar_select %p554, %s25, 3
          %s556 = smul.addr %s555, 8
          %s557 = scalar_lea.vmem %s7, %s556
        $region72: #{tpu_custom_call.1} parent=67 // pred_fallthru
          _
      $region68: #{tpu_custom_call.1} parent=5 // pred_fallthru
        _
    $region6: #{tpu_custom_call.1} parent=1 // loop_footer
      %s23 = sadd.s32 1, %s19
    $region7: #{tpu_custom_call.1} parent=1 // loop_footer_branch
      %18 = sbr.rel target = $region3
    $region8: #{tpu_custom_call.1} parent=1 // loop_exit
      _
    %558 = vsyncpa [#allocation4], 1
    %s559 = scalar_lea.sflag [#allocation4], 1
    %560 = vsyncpa %s559, 1
    %561 = vsyncpa [#allocation6], 1

</llo_original>
